<compile_context>
chip_gen: v7x
topology: tpu7x:2x2x1
jax: 0.10.0
libtpu: 0.0.40
codegen_flags: <defaults>
</compile_context>

<pallas_src>
import functools

import jax
import jax.numpy as jnp
from jax.experimental import pallas as pl
from jax.experimental.pallas import tpu as pltpu


# ----------------------------- kernels --------------------------------------


def _avg_rows_kernel(x_ref, w_ref, b_ref, o_ref, acc_ref, *, inv_hw):
    """Avg pool, sublane/lane-dense layout.

    x_ref:   (C_in, t_rows, 128)  activation tile (batch dim squeezed)
    w_ref:   (C_in, C_out) f32    pointwise projection weight (constant block)
    b_ref:   (1, C_out)    f32    bias (constant block)
    o_ref:   (1, C_out)           pooled output row for this image
    acc_ref: (C_in, 128)   f32    per-channel, per-lane running sums
    """
    t = pl.program_id(1)

    @pl.when(t == 0)
    def _init():
        acc_ref[...] = jnp.zeros_like(acc_ref)

    x = x_ref[...].astype(jnp.float32)
    acc_ref[...] += jnp.sum(x, axis=1)                        # (C_in, 128)

    @pl.when(t == pl.num_programs(1) - 1)
    def _finalize():
        s = jnp.sum(acc_ref[...], axis=1, keepdims=True)      # (C_in, 1) channel sums
        pooled = jnp.sum(s * w_ref[...], axis=0, keepdims=True)   # (1, C_out)
        o_ref[...] = (pooled * inv_hw + b_ref[...]).astype(o_ref.dtype)


def _avg_flat_kernel(x_ref, w_ref, b_ref, o_ref, acc_ref, *, inv_hw):
    """Avg pool, flat (C_in, t_hw) layout (unaligned HW / forced hw_tile).

    acc_ref: (C_in, 1) f32 running channel sums.
    """
    t = pl.program_id(1)

    @pl.when(t == 0)
    def _init():
        acc_ref[...] = jnp.zeros_like(acc_ref)

    x = x_ref[...].astype(jnp.float32)
    acc_ref[...] += jnp.sum(x, axis=-1, keepdims=True)        # (C_in, 1)

    @pl.when(t == pl.num_programs(1) - 1)
    def _finalize():
        pooled = jnp.sum(acc_ref[...] * w_ref[...], axis=0, keepdims=True)
        o_ref[...] = (pooled * inv_hw + b_ref[...]).astype(o_ref.dtype)


def _max_flat_kernel(x_ref, w_ref, b_ref, o_ref, acc_ref):
    """Max pool: project-then-pool with a fused chunked row-max.

    x_ref:   (C_in, t_hw)    activation tile kept in its INPUT dtype (no upcast)
    w_ref:   (C_in, C_out)   weight in the same dtype as x (MXU feed)
    acc_ref: (1, C_out) f32  running max of projected features (bias at finalize)
    """
    t = pl.program_id(1)

    @pl.when(t == 0)
    def _init():
        acc_ref[...] = jnp.full(acc_ref.shape, -jnp.inf, acc_ref.dtype)

    t_hw = x_ref.shape[1]
    chunk = next((c for c in (512, 256, 128) if t_hw % c == 0), t_hw)
    n_chunks = t_hw // chunk
    w = w_ref[...]

    def _chunk_max(c, running):
        i = pl.multiple_of(c * chunk, chunk)
        xs = x_ref[:, pl.ds(i, chunk)]                        # (C_in, chunk)
        feat = jax.lax.dot_general(                           # (chunk, C_out) f32
            xs, w, (((0,), (0,)), ((), ())),
            preferred_element_type=jnp.float32)
        return jnp.maximum(running, jnp.max(feat, axis=0, keepdims=True))

    if n_chunks == 1:
        feat = jax.lax.dot_general(
            x_ref[...], w, (((0,), (0,)), ((), ())),
            preferred_element_type=jnp.float32)
        acc_ref[...] = jnp.maximum(acc_ref[...],
                                   jnp.max(feat, axis=0, keepdims=True))
    else:
        acc_ref[...] = jax.lax.fori_loop(0, n_chunks, _chunk_max, acc_ref[...],
                                         unroll=n_chunks <= 8)

    @pl.when(t == pl.num_programs(1) - 1)
    def _finalize():
        o_ref[...] = (acc_ref[...] + b_ref[...]).astype(o_ref.dtype)


# ----------------------------- planning helpers -----------------------------


def _round_up(v, m):
    return (v + m - 1) // m * m


def _largest_divisor(total, quantum, cap):
    """Largest multiple of `quantum` dividing `total`, at most `cap` (elements)."""
    if total % quantum:
        return None
    t = min(total, max(quantum, cap // quantum * quantum))
    while t >= quantum:
        if total % t == 0:
            return t
        t -= quantum
    return None


def _vmem_capacity_bytes():
    try:
        cap = getattr(pltpu.get_tpu_info(), "vmem_capacity_bytes", None)
        if cap:
            return int(cap)
    except Exception:
        pass
    return 64 * 1024 * 1024     # conservative default (v7x per-TensorCore VMEM)


# ----------------------------- wrapper ---------------------------------------


def pooled_encoder_forward(x_nchw, weight, bias, *, pool_type="avg",
                           num_output_features=1, hw_tile=None):
    """Fused 1x1-conv projection + global adaptive pool.

    x_nchw: (N, C_in, H, W) float32 or bfloat16 activations.
    weight: (C_out, C_in)  1x1-conv weight (squeezed).   bias: (C_out,)
    hw_tile: testing knob -- forces the flat layout with this spatial tile
             (must be HW or a multiple of 128 that divides HW).
    Returns (N, 1, C_out) float32.
    """
    assert num_output_features == 1, "only global adaptive pool implemented"
    assert pool_type in ("avg", "max")
    N, C_in, H, W = x_nchw.shape
    C_out = weight.shape[0]
    HW = H * W
    itemsize = jnp.dtype(x_nchw.dtype).itemsize
    sub = 8 * (4 // itemsize)            # sublanes per (sub, 128) vreg tile

    # ---- generation-aware VMEM budgets (v5e/v6e: 128 MiB, v7x: 64 MiB) ------
    vmem_cap = _vmem_capacity_bytes()
    vmem_limit = (vmem_cap * 3) // 4                          # 96 MiB / 48 MiB
    w_item = itemsize if pool_type == "max" else 4
    const_bytes = 2 * (C_in * C_out * w_item + C_out * 4)     # w + b (worst case 2x)
    x_budget = max(vmem_limit - const_bytes - (2 << 20), 4 << 20)
    tile_budget = min(16 << 20, x_budget // 2)                # per-buffer cap when tiling

    def flat_fp(t_hw):    # VMEM bytes of one (C_in, t_hw) buffer (sublane padded)
        return _round_up(C_in, sub) * _round_up(t_hw, 128) * itemsize

    def rows_fp(t_rows):  # VMEM bytes of one (C_in, t_rows, 128) buffer
        return C_in * _round_up(t_rows, sub) * 128 * itemsize

    # ---- choose layout + spatial tile ----------------------------------------
    # No NCHW->NHWC transpose: a pure reshape keeps HW on the dense lane axis.
    x3 = x_nchw.reshape(N, C_in, HW)
    inv_hw = 1.0 / HW

    layout = None
    if hw_tile is not None:
        assert hw_tile == HW or (hw_tile % 128 == 0 and HW % hw_tile == 0), hw_tile
        layout, t_hw = "flat", hw_tile
    elif pool_type == "avg":
        if HW % 128 != 0 and 2 * flat_fp(HW) <= x_budget:
            layout, t_hw = "flat", HW            # one unaligned full-HW block / image
        else:
            layout = "rows"
            full_fits = 2 * rows_fp(_round_up(HW, 128) // 128) <= x_budget
            # Zero-pad HW if needed (channel sums unchanged; divide by true HW).
            # A 1024 quantum guarantees an 8-row tiling exists when we must tile.
            hw_pad = _round_up(HW, 128 if full_fits else 1024)
            if hw_pad != HW:
                x3 = jnp.pad(x3, ((0, 0), (0, 0), (0, hw_pad - HW)))
            R = hw_pad // 128
            if full_fits:
                t_rows = R
            else:
                cap_rows = max(8, tile_budget // (C_in * 128 * itemsize))
                t_rows = _largest_divisor(R, 8, cap_rows) or 8
    else:  # max pool
        layout = "flat"
        if HW % 128 != 0 and 2 * flat_fp(HW) > x_budget:
            # Edge-pad: duplicated columns project to duplicated rows -> max unchanged.
            x3 = jnp.pad(x3, ((0, 0), (0, 0), (0, _round_up(HW, 128) - HW)),
                         mode="edge")
        hw_p = x3.shape[-1]
        if 2 * flat_fp(hw_p) <= x_budget:
            t_hw = hw_p
        else:
            cap = max(128, tile_budget // (_round_up(C_in, sub) * itemsize))
            t_hw = _largest_divisor(hw_p, 128, cap) or 128

    # ---- per-layout kernel / specs -------------------------------------------
    b_k = bias.reshape(1, C_out).astype(jnp.float32)
    if layout == "rows":
        R = x3.shape[-1] // 128
        x_k = x3.reshape(N, C_in, R, 128)
        x_spec = pl.BlockSpec((None, C_in, t_rows, 128), lambda n, t: (n, 0, t, 0))
        n_t = R // t_rows
        kernel = functools.partial(_avg_rows_kernel, inv_hw=inv_hw)
        acc_shape = (C_in, 128)
        w_k = weight.T.astype(jnp.float32)
    else:
        x_k = x3
        x_spec = pl.BlockSpec((None, C_in, t_hw), lambda n, t: (n, 0, t))
        n_t = x3.shape[-1] // t_hw
        if pool_type == "avg":
            kernel = functools.partial(_avg_flat_kernel, inv_hw=inv_hw)
            acc_shape = (C_in, 1)
            w_k = weight.T.astype(jnp.float32)
        else:
            kernel = _max_flat_kernel
            acc_shape = (1, C_out)
            w_k = weight.T.astype(x_nchw.dtype)   # feed the MXU in the activation dtype

    def _call(single_buffer_consts):
        const_kw = {"pipeline_mode": pl.Buffered(1)} if single_buffer_consts else {}
        grid_spec = pltpu.PrefetchScalarGridSpec(
            num_scalar_prefetch=0,
            grid=(N, n_t),                                    # reduction axis last
            in_specs=[
                x_spec,
                pl.BlockSpec((C_in, C_out), lambda n, t: (0, 0), **const_kw),
                pl.BlockSpec((1, C_out), lambda n, t: (0, 0), **const_kw),
            ],
            out_specs=pl.BlockSpec((None, 1, C_out), lambda n, t: (n, 0, 0)),
            scratch_shapes=[pltpu.VMEM(acc_shape, jnp.float32)],
        )
        return pl.pallas_call(
            kernel,
            out_shape=jax.ShapeDtypeStruct((N, 1, C_out), jnp.float32),
            grid_spec=grid_spec,
            compiler_params=pltpu.CompilerParams(
                dimension_semantics=("parallel", "arbitrary"),
                vmem_limit_bytes=vmem_limit),
        )(x_k, w_k, b_k)

    try:
        # w/b have constant index_maps -> single-buffer them (VMEM win on v7x).
        return _call(True)
    except Exception:
        # pipeline_mode=pl.Buffered(1) is not accepted on every JAX version;
        # fall back to default double-buffered constant operands.
        return _call(False)


# ----------------------------- reference & demo ------------------------------


def _reference(x_nchw, weight, bias, pool_type="avg"):
    # Pure-JAX reference mirroring the PyTorch forward (1x1 conv -> adaptive
    # pool (1,1) -> flatten(2) -> transpose(1,2)), computed in f32.
    feat = jnp.einsum("nchw,oc->nohw", x_nchw.astype(jnp.float32),
                      weight.astype(jnp.float32)) + bias[None, :, None, None]
    if pool_type == "avg":
        pooled = jnp.mean(feat, axis=(2, 3), keepdims=True)   # (N, C_out, 1, 1)
    else:
        pooled = jnp.max(feat, axis=(2, 3), keepdims=True)
    out = pooled.reshape(x_nchw.shape[0], weight.shape[0], 1)  # flatten(start_dim=2)
    return jnp.transpose(out, (0, 2, 1))                       # (N, 1, C_out)


if __name__ == "__main__":
    key = jax.random.PRNGKey(0)
    kx, kw, kb, kx2 = jax.random.split(key, 4)

    N, C_in, H, W = 2, 4, 16, 16
    C_out = 32  # stand-in for hf_config.hidden_size / config.out_dim

    x = jax.random.normal(kx, (N, C_in, H, W), dtype=jnp.float32)
    weight = jax.random.normal(kw, (C_out, C_in), dtype=jnp.float32) * 0.1
    bias = jax.random.normal(kb, (C_out,), dtype=jnp.float32) * 0.01

    # 1) default plan: avg pool, sublane-dense rows layout, full-HW tile (grid=(N,1)).
    out = jax.block_until_ready(
        pooled_encoder_forward(x, weight, bias, pool_type="avg"))
    ref = _reference(x, weight, bias, "avg")
    assert out.shape == (N, 1, C_out), out.shape
    assert jnp.allclose(out, ref, atol=1e-4, rtol=1e-4), "avg (rows) mismatch"

    # 2) forced flat tiling: exercises the multi-step accumulator init/finalize path.
    out_t = jax.block_until_ready(
        pooled_encoder_forward(x, weight, bias, pool_type="avg", hw_tile=128))
    assert jnp.allclose(out_t, ref, atol=1e-4, rtol=1e-4), "avg (tiled) mismatch"

    # 3) max pool, f32 activations (single-chunk MXU path).
    out_m = jax.block_until_ready(
        pooled_encoder_forward(x, weight, bias, pool_type="max"))
    ref_m = _reference(x, weight, bias, "max")
    assert jnp.allclose(out_m, ref_m, atol=1e-4, rtol=1e-4), "max mismatch"

    # 4) max pool, bf16 activations at 32x32: exercises the bf16 MXU feed and
    #    the fused chunked row-max loop.
    xb = jax.random.normal(kx2, (N, C_in, 32, 32),
                           dtype=jnp.float32).astype(jnp.bfloat16)
    out_b = jax.block_until_ready(
        pooled_encoder_forward(xb, weight, bias, pool_type="max"))
    ref_b = _reference(xb, weight, bias, "max")
    assert jnp.allclose(out_b, ref_b, atol=5e-2, rtol=5e-2), "max (bf16) mismatch"

    print("KERNEL_OK")
</pallas_src>

<mosaic_0001>
module attributes {stable_mosaic.version = 11 : i64} {
  func.func @_avg_rows_kernel(%arg0: i32, %arg1: i32, %arg2: memref<1x4x2x128xf32, #tpu.memory_space<vmem>>, %arg3: memref<4x32xf32, #tpu.memory_space<vmem>>, %arg4: memref<1x32xf32, #tpu.memory_space<vmem>>, %arg5: memref<1x1x32xf32, #tpu.memory_space<vmem>>, %arg6: memref<4x128xf32, #tpu.memory_space<vmem>>) attributes {dimension_semantics = [#tpu.dimension_semantics<parallel>, #tpu.dimension_semantics<arbitrary>], iteration_bounds = array<i64: 2, 1>, scalar_prefetch = 0 : i64, scratch_operands = 1 : i64, tpu.core_type = #tpu.core_type<tc>, window_params = [{transform_indices = @transform_0, window_bounds = array<i64: 1, 4, 2, 128>}, {pipeline_mode = #tpu.pipeline_mode<synchronous>, transform_indices = @transform_1, window_bounds = array<i64: 4, 32>}, {pipeline_mode = #tpu.pipeline_mode<synchronous>, transform_indices = @transform_2, window_bounds = array<i64: 1, 32>}, {transform_indices = @transform_3, window_bounds = array<i64: 1, 1, 32>}]} {
    %c0_i32 = arith.constant 0 : i32
    %0 = arith.cmpi eq, %arg1, %c0_i32 : i32
    %1 = arith.extui %0 : i1 to i32
    %c0_i32_0 = arith.constant 0 : i32
    %2 = arith.cmpi ne, %1, %c0_i32_0 : i32
    scf.if %2 {
      %cst_10 = arith.constant 0.000000e+00 : f32
      %12 = vector.broadcast %cst_10 : f32 to vector<4x128xf32>
      %c0_11 = arith.constant 0 : index
      %c0_12 = arith.constant 0 : index
      %13 = vector.load %arg6[%c0_11, %c0_12] : memref<4x128xf32, #tpu.memory_space<vmem>>, vector<4x128xf32>
      tpu.vector_store %arg6[%c0_11, %c0_12], %12 {strides = array<i32>} : memref<4x128xf32, #tpu.memory_space<vmem>>, vector<4x128xf32>,
    } else {
    }
    %c0 = arith.constant 0 : index
    %c0_1 = arith.constant 0 : index
    %c0_2 = arith.constant 0 : index
    %c0_3 = arith.constant 0 : index
    %3 = vector.load %arg2[%c0, %c0_1, %c0_2, %c0_3] : memref<1x4x2x128xf32, #tpu.memory_space<vmem>>, vector<1x4x2x128xf32>
    %4 = vector.shape_cast %3 : vector<1x4x2x128xf32> to vector<4x2x128xf32>
    %c0_4 = arith.constant 0 : index
    %c0_5 = arith.constant 0 : index
    %5 = vector.load %arg6[%c0_4, %c0_5] : memref<4x128xf32, #tpu.memory_space<vmem>>, vector<4x128xf32>
    %cst = arith.constant dense<0.000000e+00> : vector<4x128xf32>
    %6 = vector.multi_reduction <add>, %4, %cst [1] : vector<4x2x128xf32> to vector<4x128xf32>
    %7 = arith.addf %5, %6 : vector<4x128xf32>
    %c0_6 = arith.constant 0 : index
    %c0_7 = arith.constant 0 : index
    %8 = vector.load %arg6[%c0_6, %c0_7] : memref<4x128xf32, #tpu.memory_space<vmem>>, vector<4x128xf32>
    tpu.vector_store %arg6[%c0_6, %c0_7], %7 {strides = array<i32>} : memref<4x128xf32, #tpu.memory_space<vmem>>, vector<4x128xf32>,
    %c0_i32_8 = arith.constant 0 : i32
    %9 = arith.cmpi eq, %arg1, %c0_i32_8 : i32
    %10 = arith.extui %9 : i1 to i32
    %c0_i32_9 = arith.constant 0 : i32
    %11 = arith.cmpi ne, %10, %c0_i32_9 : i32
    scf.if %11 {
      %c0_10 = arith.constant 0 : index
      %c0_11 = arith.constant 0 : index
      %12 = vector.load %arg6[%c0_10, %c0_11] : memref<4x128xf32, #tpu.memory_space<vmem>>, vector<4x128xf32>
      %cst_12 = arith.constant dense<0.000000e+00> : vector<4xf32>
      %13 = vector.multi_reduction <add>, %12, %cst_12 [1] : vector<4x128xf32> to vector<4xf32>
      %14 = vector.shape_cast %13 : vector<4xf32> to vector<4x1xf32>
      %c0_13 = arith.constant 0 : index
      %c0_14 = arith.constant 0 : index
      %15 = vector.load %arg3[%c0_13, %c0_14] : memref<4x32xf32, #tpu.memory_space<vmem>>, vector<4x32xf32>
      %16 = vector.broadcast %14 : vector<4x1xf32> to vector<4x32xf32>
      %17 = arith.mulf %16, %15 : vector<4x32xf32>
      %cst_15 = arith.constant dense<0.000000e+00> : vector<32xf32>
      %18 = vector.multi_reduction <add>, %17, %cst_15 [0] : vector<4x32xf32> to vector<32xf32>
      %19 = vector.shape_cast %18 : vector<32xf32> to vector<1x32xf32>
      %cst_16 = arith.constant 3.906250e-03 : f32
      %20 = vector.broadcast %cst_16 : f32 to vector<1x32xf32>
      %21 = arith.mulf %19, %20 : vector<1x32xf32>
      %c0_17 = arith.constant 0 : index
      %c0_18 = arith.constant 0 : index
      %22 = vector.load %arg4[%c0_17, %c0_18] : memref<1x32xf32, #tpu.memory_space<vmem>>, vector<1x32xf32>
      %23 = arith.addf %21, %22 : vector<1x32xf32>
      %c0_19 = arith.constant 0 : index
      %c0_20 = arith.constant 0 : index
      %c0_21 = arith.constant 0 : index
      %24 = vector.load %arg5[%c0_19, %c0_20, %c0_21] : memref<1x1x32xf32, #tpu.memory_space<vmem>>, vector<1x1x32xf32>
      %25 = vector.shape_cast %24 : vector<1x1x32xf32> to vector<1x32xf32>
      %26 = vector.shape_cast %23 : vector<1x32xf32> to vector<1x1x32xf32>
      tpu.vector_store %arg5[%c0_19, %c0_20, %c0_21], %26 {strides = array<i32>} : memref<1x1x32xf32, #tpu.memory_space<vmem>>, vector<1x1x32xf32>,
    } else {
    }
    return
  }
  func.func @transform_0(%arg0: i32, %arg1: i32) -> (i32, i32, i32, i32) {
    %c0_i32 = arith.constant 0 : i32
    %c0_i32_0 = arith.constant 0 : i32
    %c0_i32_1 = arith.constant 0 : i32
    return %arg0, %c0_i32, %arg1, %c0_i32_0 : i32, i32, i32, i32
  }
  func.func @transform_1(%arg0: i32, %arg1: i32) -> (i32, i32) {
    %c0_i32 = arith.constant 0 : i32
    %c0_i32_0 = arith.constant 0 : i32
    %c0_i32_1 = arith.constant 0 : i32
    return %c0_i32, %c0_i32_0 : i32, i32
  }
  func.func @transform_2(%arg0: i32, %arg1: i32) -> (i32, i32) {
    %c0_i32 = arith.constant 0 : i32
    %c0_i32_0 = arith.constant 0 : i32
    %c0_i32_1 = arith.constant 0 : i32
    return %c0_i32, %c0_i32_0 : i32, i32
  }
  func.func @transform_3(%arg0: i32, %arg1: i32) -> (i32, i32, i32) {
    %c0_i32 = arith.constant 0 : i32
    %c0_i32_0 = arith.constant 0 : i32
    %c0_i32_1 = arith.constant 0 : i32
    return %arg0, %c0_i32, %c0_i32_0 : i32, i32, i32
  }
}

module attributes {stable_mosaic.version = 11 : i64} {
  func.func @_avg_rows_kernel(%arg0: i32, %arg1: i32, %arg2: memref<1x4x2x128xf32, #tpu.memory_space<vmem>>, %arg3: memref<4x32xf32, #tpu.memory_space<vmem>>, %arg4: memref<1x32xf32, #tpu.memory_space<vmem>>, %arg5: memref<1x1x32xf32, #tpu.memory_space<vmem>>, %arg6: memref<4x128xf32, #tpu.memory_space<vmem>>) attributes {dimension_semantics = [#tpu.dimension_semantics<parallel>, #tpu.dimension_semantics<arbitrary>], iteration_bounds = array<i64: 2, 1>, scalar_prefetch = 0 : i64, scratch_operands = 1 : i64, tpu.core_type = #tpu.core_type<tc>, window_params = [{transform_indices = @transform_0, window_bounds = array<i64: 1, 4, 2, 128>}, {pipeline_mode = #tpu.pipeline_mode<synchronous>, transform_indices = @transform_1, window_bounds = array<i64: 4, 32>}, {pipeline_mode = #tpu.pipeline_mode<synchronous>, transform_indices = @transform_2, window_bounds = array<i64: 1, 32>}, {transform_indices = @transform_3, window_bounds = array<i64: 1, 1, 32>}]} {
    %c0_i32 = arith.constant 0 : i32
    %0 = arith.cmpi eq, %arg1, %c0_i32 : i32
    %1 = arith.extui %0 : i1 to i32
    %c0_i32_0 = arith.constant 0 : i32
    %2 = arith.cmpi ne, %1, %c0_i32_0 : i32
    scf.if %2 {
      %cst_10 = arith.constant 0.000000e+00 : f32
      %12 = vector.broadcast %cst_10 : f32 to vector<4x128xf32>
      %c0_11 = arith.constant 0 : index
      %c0_12 = arith.constant 0 : index
      %13 = vector.load %arg6[%c0_11, %c0_12] : memref<4x128xf32, #tpu.memory_space<vmem>>, vector<4x128xf32>
      tpu.vector_store %arg6[%c0_11, %c0_12], %12 {strides = array<i32>} : memref<4x128xf32, #tpu.memory_space<vmem>>, vector<4x128xf32>,
    } else {
    }
    %c0 = arith.constant 0 : index
    %c0_1 = arith.constant 0 : index
    %c0_2 = arith.constant 0 : index
    %c0_3 = arith.constant 0 : index
    %3 = vector.load %arg2[%c0, %c0_1, %c0_2, %c0_3] : memref<1x4x2x128xf32, #tpu.memory_space<vmem>>, vector<1x4x2x128xf32>
    %4 = vector.shape_cast %3 : vector<1x4x2x128xf32> to vector<4x2x128xf32>
    %c0_4 = arith.constant 0 : index
    %c0_5 = arith.constant 0 : index
    %5 = vector.load %arg6[%c0_4, %c0_5] : memref<4x128xf32, #tpu.memory_space<vmem>>, vector<4x128xf32>
    %cst = arith.constant dense<0.000000e+00> : vector<4x128xf32>
    %6 = vector.multi_reduction <add>, %4, %cst [1] : vector<4x2x128xf32> to vector<4x128xf32>
    %7 = arith.addf %5, %6 : vector<4x128xf32>
    %c0_6 = arith.constant 0 : index
    %c0_7 = arith.constant 0 : index
    %8 = vector.load %arg6[%c0_6, %c0_7] : memref<4x128xf32, #tpu.memory_space<vmem>>, vector<4x128xf32>
    tpu.vector_store %arg6[%c0_6, %c0_7], %7 {strides = array<i32>} : memref<4x128xf32, #tpu.memory_space<vmem>>, vector<4x128xf32>,
    %c0_i32_8 = arith.constant 0 : i32
    %9 = arith.cmpi eq, %arg1, %c0_i32_8 : i32
    %10 = arith.extui %9 : i1 to i32
    %c0_i32_9 = arith.constant 0 : i32
    %11 = arith.cmpi ne, %10, %c0_i32_9 : i32
    scf.if %11 {
      %c0_10 = arith.constant 0 : index
      %c0_11 = arith.constant 0 : index
      %12 = vector.load %arg6[%c0_10, %c0_11] : memref<4x128xf32, #tpu.memory_space<vmem>>, vector<4x128xf32>
      %cst_12 = arith.constant dense<0.000000e+00> : vector<4xf32>
      %13 = vector.multi_reduction <add>, %12, %cst_12 [1] : vector<4x128xf32> to vector<4xf32>
      %14 = vector.shape_cast %13 : vector<4xf32> to vector<4x1xf32>
      %c0_13 = arith.constant 0 : index
      %c0_14 = arith.constant 0 : index
      %15 = vector.load %arg3[%c0_13, %c0_14] : memref<4x32xf32, #tpu.memory_space<vmem>>, vector<4x32xf32>
      %16 = vector.broadcast %14 : vector<4x1xf32> to vector<4x32xf32>
      %17 = arith.mulf %16, %15 : vector<4x32xf32>
      %cst_15 = arith.constant dense<0.000000e+00> : vector<32xf32>
      %18 = vector.multi_reduction <add>, %17, %cst_15 [0] : vector<4x32xf32> to vector<32xf32>
      %19 = vector.shape_cast %18 : vector<32xf32> to vector<1x32xf32>
      %cst_16 = arith.constant 3.906250e-03 : f32
      %20 = vector.broadcast %cst_16 : f32 to vector<1x32xf32>
      %21 = arith.mulf %19, %20 : vector<1x32xf32>
      %c0_17 = arith.constant 0 : index
      %c0_18 = arith.constant 0 : index
      %22 = vector.load %arg4[%c0_17, %c0_18] : memref<1x32xf32, #tpu.memory_space<vmem>>, vector<1x32xf32>
      %23 = arith.addf %21, %22 : vector<1x32xf32>
      %c0_19 = arith.constant 0 : index
      %c0_20 = arith.constant 0 : index
      %c0_21 = arith.constant 0 : index
      %24 = vector.load %arg5[%c0_19, %c0_20, %c0_21] : memref<1x1x32xf32, #tpu.memory_space<vmem>>, vector<1x1x32xf32>
      %25 = vector.shape_cast %24 : vector<1x1x32xf32> to vector<1x32xf32>
      %26 = vector.shape_cast %23 : vector<1x32xf32> to vector<1x1x32xf32>
      tpu.vector_store %arg5[%c0_19, %c0_20, %c0_21], %26 {strides = array<i32>} : memref<1x1x32xf32, #tpu.memory_space<vmem>>, vector<1x1x32xf32>,
    } else {
    }
    return
  }
  func.func @transform_0(%arg0: i32, %arg1: i32) -> (i32, i32, i32, i32) {
    %c0_i32 = arith.constant 0 : i32
    %c0_i32_0 = arith.constant 0 : i32
    %c0_i32_1 = arith.constant 0 : i32
    return %arg0, %c0_i32, %arg1, %c0_i32_0 : i32, i32, i32, i32
  }
  func.func @transform_1(%arg0: i32, %arg1: i32) -> (i32, i32) {
    %c0_i32 = arith.constant 0 : i32
    %c0_i32_0 = arith.constant 0 : i32
    %c0_i32_1 = arith.constant 0 : i32
    return %c0_i32, %c0_i32_0 : i32, i32
  }
  func.func @transform_2(%arg0: i32, %arg1: i32) -> (i32, i32) {
    %c0_i32 = arith.constant 0 : i32
    %c0_i32_0 = arith.constant 0 : i32
    %c0_i32_1 = arith.constant 0 : i32
    return %c0_i32, %c0_i32_0 : i32, i32
  }
  func.func @transform_3(%arg0: i32, %arg1: i32) -> (i32, i32, i32) {
    %c0_i32 = arith.constant 0 : i32
    %c0_i32_0 = arith.constant 0 : i32
    %c0_i32_1 = arith.constant 0 : i32
    return %arg0, %c0_i32, %c0_i32_0 : i32, i32, i32
  }
}

</mosaic_0001>

<llo_original>
// kernel: tpu_custom_call.1
$region0: #{tpu_custom_call.1}
  #allocation0 [shape = 'u32[]', space=smem, size = 0x4, offset = 0x4, fixed_abs, tag = 'smem constant byte address 0x4 - core index']
  #allocation1 [shape = 'u32[144,128]{1,0:T(1,128)}', space=vmem, size = 0x12000, scoped, tag = 'internal scratch']
  #allocation2 [shape = 'f32[4,128]{1,0:T(4,128)}', space=vmem, size = 0x800, scoped, tag = 'scratch operand']
  %s0 = inlined_call_operand.hbm [shape: f32[2,4,2,128], index: 0, kind: input, shape index: {}]
  %s1 = inlined_call_operand.hbm [shape: f32[4,32], index: 1, kind: input, shape index: {}]
  %s2 = inlined_call_operand.vmem [shape: f32[1,32], index: 2, kind: input, shape index: {}]
  %s3 = inlined_call_operand.hbm [shape: f32[2,1,32], index: 3, kind: output, shape index: {}]
  %s4 = sld [smem:[#allocation0]]
  $region61: #{tpu_custom_call.1} parent=0
    _
  %s6 = ssub.s32 1, %s4
  %s7 = scalar_select 0, %s6, %s4
  $region1: #{tpu_custom_call.1} parent=0
    #allocation3 [shape = 'u8[8192]{0}', space=vmem, size = 0x2000, scoped, tag = 'input window, operand 0']
    #allocation4 [shape = 's32[2]{0}', space=sflag, size = 0x8, scoped, tag = 'scoped memory for tpu_custom_call.1']
    #allocation5 [shape = 's32[2]{0}', space=sflag, size = 0x8, scoped, tag = 'scoped memory for tpu_custom_call.1']
    #allocation6 [shape = 'u8[2048]{0}', space=vmem, size = 0x800, scoped, tag = 'input window, operand 1, single buffered']
    #allocation7 [shape = 's32[1]{0}', space=sflag, size = 0x4, scoped, tag = 'scoped memory for tpu_custom_call.1']
    #allocation8 [shape = 'u8[1024]{0}', space=vmem, size = 0x400, scoped, tag = 'output window, operand 0']
    %8 = vsyncpa [#allocation4], 0
    %s9 = scalar_lea.sflag [#allocation4], 1
    %10 = vsyncpa %s9, 0
    %11 = vsyncpa [#allocation7], 0
    %12 = vsyncpa [#allocation5], 0
    %s13 = scalar_lea.sflag [#allocation5], 1
    %14 = vsyncpa %s13, 0
    loop: start=0, step=1, limit=4
    $region2: #{tpu_custom_call.1} parent=1 // loop_pre_header
      _
    $region3: #{tpu_custom_call.1} parent=1 // loop_header
      %s16 = sphi 0, %s20
      %p17 = scmp.ge.s32.totalorder %s16, 4
      %s23 = sphi 0, %s35
      %s24 = sphi 0, %s31
      %s25 = sphi 0, %s23
      %s26 = sphi 0, %s24
      %s27 = sphi 0, %s25
      %s28 = sphi 0, %s26
      %s40 = sphi 0, %s42
      %s43 = sphi 0, %s40
      %s44 = sphi 0, %s43
      %s60 = sphi 0, %s44
      %s64 = sphi 0, %s64
      %s66 = sphi 0, %s64
      %s67 = sphi 0, %s66
      %s81 = sphi 0, %s67
      %s85 = sphi 0, %s85
      %s87 = sphi 0, %s85
      %s88 = sphi 0, %s87
      %s102 = sphi 0, %s88
      %s108 = sphi 0, %s110
      %s111 = sphi 0, %s108
      %s112 = sphi 0, %s111
      %s128 = sphi 0, %s112
    $region4: #{tpu_custom_call.1} parent=1 // loop_header_branch
      %19 = sbr.rel (%p17) target = $region8
    $region5: #{tpu_custom_call.1} parent=1 // loop_body
      %s21 = ssub.s32 %s16, 1
      %s22 = ssub.s32 %s16, 2
      %s29 = sadd.s32 1, %s24
      %p30 = scmp.ge.s32.totalorder %s29, 1
      %s31 = scalar_select %p30, 0, %s29
      %s32 = sadd.s32 1, %s23
      %s33 = scalar_select %p30, %s32, %s23
      %p34 = scmp.ge.s32.totalorder %s33, 2
      %s35 = scalar_select %p34, 0, %s33
      %s36 = ssub.s32 %s23, %s35
      %s37 = ssub.s32 %s24, %s31
      %s38 = sor.u32 %s36, %s37
      %p39 = scmp.eq.s32.totalorder %s38, 0
      %s41 = sadd.s32 %s40, 1
      %s42 = scalar_select %p39, %s40, %s41
      %p45 = pneg %p39
      %p46 = scmp.eq.s32.totalorder %s16, 1
      %p47 = por %p45, %p46
      %p48 = scmp.ne.s32.totalorder %s40, %s43
      %p49 = scmp.eq.s32.totalorder %s16, 0
      %p50 = por %p48, %p49
      %p51 = scmp.ne.s32.totalorder %s40, %s43
      %p52 = scmp.eq.s32.totalorder %s21, 1
      %p53 = por %p51, %p52
      %p54 = scmp.ne.s32.totalorder %s43, %s44
      %p55 = scmp.eq.s32.totalorder %s21, 0
      %p56 = por %p54, %p55
      %p57 = scmp.ne.s32.totalorder %s43, %s44
      %p58 = scmp.eq.s32.totalorder %s22, 1
      %p59 = por %p57, %p58
      %p61 = scmp.ne.s32.totalorder %s44, %s60
      %p62 = scmp.eq.s32.totalorder %s22, 0
      %p63 = por %p61, %p62
      %s65 = sadd.s32 %s64, 1
      %p68 = scmp.eq.s32.totalorder %s16, 1
      %p69 = scmp.ne.s32.totalorder %s64, %s66
      %p70 = scmp.eq.s32.totalorder %s16, 0
      %p71 = por %p69, %p70
      %p72 = scmp.ne.s32.totalorder %s64, %s66
      %p73 = scmp.eq.s32.totalorder %s21, 1
      %p74 = por %p72, %p73
      %p75 = scmp.ne.s32.totalorder %s66, %s67
      %p76 = scmp.eq.s32.totalorder %s21, 0
      %p77 = por %p75, %p76
      %p78 = scmp.ne.s32.totalorder %s66, %s67
      %p79 = scmp.eq.s32.totalorder %s22, 1
      %p80 = por %p78, %p79
      %p82 = scmp.ne.s32.totalorder %s67, %s81
      %p83 = scmp.eq.s32.totalorder %s22, 0
      %p84 = por %p82, %p83
      %s86 = sadd.s32 %s85, 1
      %p89 = scmp.eq.s32.totalorder %s16, 1
      %p90 = scmp.ne.s32.totalorder %s85, %s87
      %p91 = scmp.eq.s32.totalorder %s16, 0
      %p92 = por %p90, %p91
      %p93 = scmp.ne.s32.totalorder %s85, %s87
      %p94 = scmp.eq.s32.totalorder %s21, 1
      %p95 = por %p93, %p94
      %p96 = scmp.ne.s32.totalorder %s87, %s88
      %p97 = scmp.eq.s32.totalorder %s21, 0
      %p98 = por %p96, %p97
      %p99 = scmp.ne.s32.totalorder %s87, %s88
      %p100 = scmp.eq.s32.totalorder %s22, 1
      %p101 = por %p99, %p100
      %p103 = scmp.ne.s32.totalorder %s88, %s102
      %p104 = scmp.eq.s32.totalorder %s22, 0
      %p105 = por %p103, %p104
      %s106 = ssub.s32 %s23, %s35
      %p107 = scmp.eq.s32.totalorder %s106, 0
      %s109 = sadd.s32 %s108, 1
      %s110 = scalar_select %p107, %s108, %s109
      %p113 = pneg %p107
      %p114 = scmp.eq.s32.totalorder %s16, 1
      %p115 = por %p113, %p114
      %p116 = scmp.ne.s32.totalorder %s108, %s111
      %p117 = scmp.eq.s32.totalorder %s16, 0
      %p118 = por %p116, %p117
      %p119 = scmp.ne.s32.totalorder %s108, %s111
      %p120 = scmp.eq.s32.totalorder %s21, 1
      %p121 = por %p119, %p120
      %p122 = scmp.ne.s32.totalorder %s111, %s112
      %p123 = scmp.eq.s32.totalorder %s21, 0
      %p124 = por %p122, %p123
      %p125 = scmp.ne.s32.totalorder %s111, %s112
      %p126 = scmp.eq.s32.totalorder %s22, 1
      %p127 = por %p125, %p126
      %p129 = scmp.ne.s32.totalorder %s112, %s128
      %p130 = scmp.eq.s32.totalorder %s22, 0
      %p131 = por %p129, %p130
      %p132 = scmp.le.s32.totalorder 1, %s16
      %p133 = scmp.lt.s32.totalorder %s16, 3
      %p134 = pnand %p132, %p133
      %p135 = pneg %p134
      // Predicated region
      $region9: #{tpu_custom_call.1} parent=5 // pred_check
        _
      $region10: #{tpu_custom_call.1} parent=5 // pred_check_branch
        %137 = sbr.rel (%p134) target = $region12
      $region11: #{tpu_custom_call.1} parent=5 // pred_region
        %s138 = ssub.s32 %s16, 1
        // Predicated region
        $region13: #{tpu_custom_call.1} parent=11 // pred_check
          %p139 = pneg %p77
        $region14: #{tpu_custom_call.1} parent=11 // pred_check_branch
          %141 = sbr.rel (%p139) target = $region16
        $region15: #{tpu_custom_call.1} parent=11 // pred_region
          %s143 = ssub.s32 64, 64
          %144 = vsyncadd [#allocation7], %s143
          %s146 = sshll.u32 [#allocation6], 4
          %s147 = int_to_ptr.vmem [resolvable:$true] %s146
          %149 = dma.hbm_to_vmem [thread:$0]  %s1, 64, %s147, [#allocation7]
        $region16: #{tpu_custom_call.1} parent=11 // pred_fallthru
          _
        // Predicated region
        $region17: #{tpu_custom_call.1} parent=11 // pred_check
          %p150 = pneg %p98
        $region18: #{tpu_custom_call.1} parent=11 // pred_check_branch
          %152 = sbr.rel (%p150) target = $region20
        $region19: #{tpu_custom_call.1} parent=11 // pred_region
          _
        $region20: #{tpu_custom_call.1} parent=11 // pred_fallthru
          _
      $region12: #{tpu_custom_call.1} parent=5 // pred_fallthru
        _
      %p153 = scmp.lt.s32.totalorder %s16, 2
      // Predicated region
      $region21: #{tpu_custom_call.1} parent=5 // pred_check
        %p154 = pneg %p153
      $region22: #{tpu_custom_call.1} parent=5 // pred_check_branch
        %156 = sbr.rel (%p154) target = $region24
      $region23: #{tpu_custom_call.1} parent=5 // pred_region
        // Predicated region
        $region25: #{tpu_custom_call.1} parent=23 // pred_check
          %p157 = pneg %p50
        $region26: #{tpu_custom_call.1} parent=23 // pred_check_branch
          %159 = sbr.rel (%p157) target = $region28
        $region27: #{tpu_custom_call.1} parent=23 // pred_region
          %s160 = sand.u32 %s40, 1
          %s161 = scalar_lea.sflag [#allocation4], %s160
          %s162 = sand.u32 %s40, 1
          %s163 = smul.addr %s162, 8
          %s164 = scalar_lea.vmem [#allocation3], %s163
          %s166 = ssub.s32 128, 128
          %167 = vsyncadd %s161, %s166
          %s168 = smul.addr %s23, 4
          %s169 = sadd.s32 %s24, %s168
          %s170 = smul.addr %s169, 32
          %s171 = scalar_lea.hbm %s0, %s170
          %s172 = sshll.u32 %s164, 4
          %s173 = int_to_ptr.vmem [resolvable:$true] %s172
          %178 = dma.hbm_to_vmem [thread:$0]  %s171, 128, %s173, %s161, 32, 32, 2
        $region28: #{tpu_custom_call.1} parent=23 // pred_fallthru
          _
      $region24: #{tpu_custom_call.1} parent=5 // pred_fallthru
        _
      %p179 = scmp.le.s32.totalorder 1, %s16
      %p180 = scmp.lt.s32.totalorder %s16, 3
      %p181 = pnand %p179, %p180
      %p182 = pneg %p181
      // Predicated region
      $region29: #{tpu_custom_call.1} parent=5 // pred_check
        _
      $region30: #{tpu_custom_call.1} parent=5 // pred_check_branch
        %184 = sbr.rel (%p181) target = $region32
      $region31: #{tpu_custom_call.1} parent=5 // pred_region
        %s185 = ssub.s32 %s16, 1
        %s186 = sand.u32 %s43, 1
        %s187 = scalar_lea.sflag [#allocation4], %s186
        %s188 = sand.u32 %s43, 1
        %s189 = smul.addr %s188, 8
        %s190 = scalar_lea.vmem [#allocation3], %s189
        // Predicated region
        $region33: #{tpu_custom_call.1} parent=31 // pred_check
          %p191 = pneg %p56
        $region34: #{tpu_custom_call.1} parent=31 // pred_check_branch
          %193 = sbr.rel (%p191) target = $region36
        $region35: #{tpu_custom_call.1} parent=31 // pred_region
          %194 = dma.done %s187, 128
        $region36: #{tpu_custom_call.1} parent=31 // pred_fallthru
          _
        // Predicated region
        $region37: #{tpu_custom_call.1} parent=31 // pred_check
          %p195 = pneg %p77
        $region38: #{tpu_custom_call.1} parent=31 // pred_check_branch
          %197 = sbr.rel (%p195) target = $region40
        $region39: #{tpu_custom_call.1} parent=31 // pred_region
          %198 = dma.done [#allocation7], 64
        $region40: #{tpu_custom_call.1} parent=31 // pred_fallthru
          _
        %s199 = sand.u32 %s43, 1
        %s200 = scalar_lea.sflag [#allocation4], %s199
        %s201 = sand.u32 %s43, 1
        %s202 = smul.addr %s201, 8
        %s203 = scalar_lea.vmem [#allocation3], %s202
        %p204 = pneg %p56
        %p205 = pneg %p53
        %p206 = pneg %p77
        %p207 = pneg %p74
        %p208 = pneg %p98
        %p209 = pneg %p95
        %p210 = pneg %p124
        %p211 = pneg %p121
        %s212 = sand.u32 %s111, 1
        %s213 = scalar_lea.sflag [#allocation5], %s212
        %s214 = sand.u32 %s111, 1
        %s215 = scalar_lea.vmem [#allocation8], %s214
        %p216 = scmp.eq.s32.totalorder %s26, 0
        // Predicated region
        $region41: #{tpu_custom_call.1} parent=31 // pred_check
          %p217 = pneg %p216
        $region42: #{tpu_custom_call.1} parent=31 // pred_check_branch
          %219 = sbr.rel (%p217) target = $region44
        $region43: #{tpu_custom_call.1} parent=31 // pred_region
          %220 = vst [vmem:[#allocation2] sm:$0xf] 0.0
        $region44: #{tpu_custom_call.1} parent=31 // pred_fallthru
          _
        %v221 = vld [vmem:[%s190] sm:$0x3]
        %v222 = vld [vmem:[%s190 + $0x2] sm:$0x3]
        %v223 = vld [vmem:[%s190 + $0x4] sm:$0x3]
        %v224 = vld [vmem:[%s190 + $0x6] sm:$0x3]
        %v225 = vld [vmem:[#allocation2] sm:$0xf]
        %vm226 = vcmask 1041408
        %v227 = vsel %vm226, %v221, 0.0
        %v228 = vrot.slane %v227, 4
        %v229 = vadd.f32 %v227, %v228
        %v230 = vrot.slane %v229, 2
        %v231 = vadd.f32 %v229, %v230
        %v232 = vrot.slane %v231, 1
        %v233 = vadd.f32 %v231, %v232
        %v234 = vsel %vm226, %v222, 0.0
        %v235 = vrot.slane %v234, 4
        %v236 = vadd.f32 %v234, %v235
        %v237 = vrot.slane %v236, 2
        %v238 = vadd.f32 %v236, %v237
        %v239 = vrot.slane %v238, 1
        %v240 = vadd.f32 %v238, %v239
        %v241 = vsel %vm226, %v223, 0.0
        %v242 = vrot.slane %v241, 4
        %v243 = vadd.f32 %v241, %v242
        %v244 = vrot.slane %v243, 2
        %v245 = vadd.f32 %v243, %v244
        %v246 = vrot.slane %v245, 1
        %v247 = vadd.f32 %v245, %v246
        %v248 = vsel %vm226, %v224, 0.0
        %v249 = vrot.slane %v248, 4
        %v250 = vadd.f32 %v248, %v249
        %v251 = vrot.slane %v250, 2
        %v252 = vadd.f32 %v250, %v251
        %v253 = vrot.slane %v252, 1
        %v254 = vadd.f32 %v252, %v253
        %vm259 = vcmask 1041409
        %v260 = vsel %vm259, %v240, %v233
        %vm261 = vcmask 1042434
        %v262 = vsel %vm261, %v247, %v260
        %vm263 = vcmask 1043459
        %v264 = vsel %vm263, %v254, %v262
        %v266 = vadd.f32 %v225, %v264
        %267 = vst [vmem:[#allocation2] sm:$0xf] %v266
        // Predicated region
        $region45: #{tpu_custom_call.1} parent=31 // pred_check
          %p268 = pneg %p216
        $region46: #{tpu_custom_call.1} parent=31 // pred_check_branch
          %270 = sbr.rel (%p268) target = $region48
        $region47: #{tpu_custom_call.1} parent=31 // pred_region
          %v271 = vld [vmem:[#allocation2] sm:$0xf]
          %vm272 = vcmask 1043456
          %v273 = vsel %vm272, %v271, 0.0
          %274 = vadd.xlane.f32.xlu0 %v273
          %v275 = vpop.xlane.xlu0 %274
          %v276 = vld [vmem:[#allocation6] sm:$0xf]
          %v277 = vmul.f32 %v275, %v276
          %vm278 = vcmask 257024
          %v279 = vsel %vm278, %v277, 0.0
          %v280 = vrot.slane %v279, 4
          %v281 = vadd.f32 %v279, %v280
          %v282 = vrot.slane %v281, 2
          %v283 = vadd.f32 %v281, %v282
          %v284 = vrot.slane %v283, 1
          %v285 = vadd.f32 %v283, %v284
          %v286 = vmul.f32 %v285, 0.00390625
          %v287 = vld [vmem:[%s2] sm:$0x1]
          %v288 = vadd.f32 %v286, %v287
          %vm289 = vcmask 253952
          %290 = vst.msk [vmem:[%s215] sm:$0x1] %vm289, %v288
        $region48: #{tpu_custom_call.1} parent=31 // pred_fallthru
          _
        %s291 = sand.u32 %s111, 1
        %s292 = scalar_lea.sflag [#allocation5], %s291
        %s293 = sand.u32 %s111, 1
        %s294 = scalar_lea.vmem [#allocation8], %s293
        // Predicated region
        $region49: #{tpu_custom_call.1} parent=31 // pred_check
          %p295 = pneg %p121
        $region50: #{tpu_custom_call.1} parent=31 // pred_check_branch
          %297 = sbr.rel (%p295) target = $region52
        $region51: #{tpu_custom_call.1} parent=31 // pred_region
          %s299 = ssub.s32 16, 16
          %300 = vsyncadd %s292, %s299
          %s301 = smul.addr %s25, 16
          %s302 = scalar_lea.hbm %s3, %s301
          %s304 = sshll.u32 %s294, 4
          %s305 = int_to_ptr.vmem [resolvable:$true] %s304
          %307 = dma.vmem_to_hbm [thread:$0]  %s305, 16, %s302, %s292
        $region52: #{tpu_custom_call.1} parent=31 // pred_fallthru
          _
      $region32: #{tpu_custom_call.1} parent=5 // pred_fallthru
        _
      %p308 = scmp.le.s32.totalorder 2, %s16
      // Predicated region
      $region53: #{tpu_custom_call.1} parent=5 // pred_check
        %p309 = pneg %p308
      $region54: #{tpu_custom_call.1} parent=5 // pred_check_branch
        %311 = sbr.rel (%p309) target = $region56
      $region55: #{tpu_custom_call.1} parent=5 // pred_region
        %s312 = ssub.s32 %s16, 2
        // Predicated region
        $region57: #{tpu_custom_call.1} parent=55 // pred_check
          %p313 = pneg %p127
        $region58: #{tpu_custom_call.1} parent=55 // pred_check_branch
          %315 = sbr.rel (%p313) target = $region60
        $region59: #{tpu_custom_call.1} parent=55 // pred_region
          %s316 = sand.u32 %s112, 1
          %s317 = scalar_lea.sflag [#allocation5], %s316
          %s318 = sand.u32 %s112, 1
          %s319 = scalar_lea.vmem [#allocation8], %s318
          %320 = dma.done %s317, 16
        $region60: #{tpu_custom_call.1} parent=55 // pred_fallthru
          _
      $region56: #{tpu_custom_call.1} parent=5 // pred_fallthru
        _
    $region6: #{tpu_custom_call.1} parent=1 // loop_footer
      %s20 = sadd.s32 1, %s16
    $region7: #{tpu_custom_call.1} parent=1 // loop_footer_branch
      %15 = sbr.rel target = $region3
    $region8: #{tpu_custom_call.1} parent=1 // loop_exit
      _
    %321 = vsyncpa [#allocation4], 1
    %s322 = scalar_lea.sflag [#allocation4], 1
    %323 = vsyncpa %s322, 1
    %324 = vsyncpa [#allocation7], 1
    %325 = vsyncpa [#allocation5], 1
    %s326 = scalar_lea.sflag [#allocation5], 1
    %327 = vsyncpa %s326, 1

// kernel: tpu_custom_call.1
$region0: #{tpu_custom_call.1}
  #allocation0 [shape = 'u32[]', space=smem, size = 0x4, offset = 0x4, fixed_abs, tag = 'smem constant byte address 0x4 - core index']
  #allocation1 [shape = 'u32[144,128]{1,0:T(1,128)}', space=vmem, size = 0x12000, scoped, tag = 'internal scratch']
  #allocation2 [shape = 'f32[4,128]{1,0:T(4,128)}', space=vmem, size = 0x800, scoped, tag = 'scratch operand']
  %s0 = inlined_call_operand.hbm [shape: f32[2,4,2,128], index: 0, kind: input, shape index: {}]
  %s1 = inlined_call_operand.hbm [shape: f32[4,32], index: 1, kind: input, shape index: {}]
  %s2 = inlined_call_operand.vmem [shape: f32[1,32], index: 2, kind: input, shape index: {}]
  %s3 = inlined_call_operand.hbm [shape: f32[2,1,32], index: 3, kind: output, shape index: {}]
  %s4 = sld [smem:[#allocation0]]
  $region61: #{tpu_custom_call.1} parent=0
    _
  %s6 = ssub.s32 1, %s4
  %s7 = scalar_select 0, %s6, %s4
  $region1: #{tpu_custom_call.1} parent=0
    #allocation3 [shape = 'u8[8192]{0}', space=vmem, size = 0x2000, scoped, tag = 'input window, operand 0']
    #allocation4 [shape = 's32[2]{0}', space=sflag, size = 0x8, scoped, tag = 'scoped memory for tpu_custom_call.1']
    #allocation5 [shape = 's32[2]{0}', space=sflag, size = 0x8, scoped, tag = 'scoped memory for tpu_custom_call.1']
    #allocation6 [shape = 'u8[2048]{0}', space=vmem, size = 0x800, scoped, tag = 'input window, operand 1, single buffered']
    #allocation7 [shape = 's32[1]{0}', space=sflag, size = 0x4, scoped, tag = 'scoped memory for tpu_custom_call.1']
    #allocation8 [shape = 'u8[1024]{0}', space=vmem, size = 0x400, scoped, tag = 'output window, operand 0']
    %8 = vsyncpa [#allocation4], 0
    %s9 = scalar_lea.sflag [#allocation4], 1
    %10 = vsyncpa %s9, 0
    %11 = vsyncpa [#allocation7], 0
    %12 = vsyncpa [#allocation5], 0
    %s13 = scalar_lea.sflag [#allocation5], 1
    %14 = vsyncpa %s13, 0
    loop: start=0, step=1, limit=4
    $region2: #{tpu_custom_call.1} parent=1 // loop_pre_header
      _
    $region3: #{tpu_custom_call.1} parent=1 // loop_header
      %s16 = sphi 0, %s20
      %p17 = scmp.ge.s32.totalorder %s16, 4
      %s23 = sphi 0, %s35
      %s24 = sphi 0, %s31
      %s25 = sphi 0, %s23
      %s26 = sphi 0, %s24
      %s27 = sphi 0, %s25
      %s28 = sphi 0, %s26
      %s40 = sphi 0, %s42
      %s43 = sphi 0, %s40
      %s44 = sphi 0, %s43
      %s60 = sphi 0, %s44
      %s64 = sphi 0, %s64
      %s66 = sphi 0, %s64
      %s67 = sphi 0, %s66
      %s81 = sphi 0, %s67
      %s85 = sphi 0, %s85
      %s87 = sphi 0, %s85
      %s88 = sphi 0, %s87
      %s102 = sphi 0, %s88
      %s108 = sphi 0, %s110
      %s111 = sphi 0, %s108
      %s112 = sphi 0, %s111
      %s128 = sphi 0, %s112
    $region4: #{tpu_custom_call.1} parent=1 // loop_header_branch
      %19 = sbr.rel (%p17) target = $region8
    $region5: #{tpu_custom_call.1} parent=1 // loop_body
      %s21 = ssub.s32 %s16, 1
      %s22 = ssub.s32 %s16, 2
      %s29 = sadd.s32 1, %s24
      %p30 = scmp.ge.s32.totalorder %s29, 1
      %s31 = scalar_select %p30, 0, %s29
      %s32 = sadd.s32 1, %s23
      %s33 = scalar_select %p30, %s32, %s23
      %p34 = scmp.ge.s32.totalorder %s33, 2
      %s35 = scalar_select %p34, 0, %s33
      %s36 = ssub.s32 %s23, %s35
      %s37 = ssub.s32 %s24, %s31
      %s38 = sor.u32 %s36, %s37
      %p39 = scmp.eq.s32.totalorder %s38, 0
      %s41 = sadd.s32 %s40, 1
      %s42 = scalar_select %p39, %s40, %s41
      %p45 = pneg %p39
      %p46 = scmp.eq.s32.totalorder %s16, 1
      %p47 = por %p45, %p46
      %p48 = scmp.ne.s32.totalorder %s40, %s43
      %p49 = scmp.eq.s32.totalorder %s16, 0
      %p50 = por %p48, %p49
      %p51 = scmp.ne.s32.totalorder %s40, %s43
      %p52 = scmp.eq.s32.totalorder %s21, 1
      %p53 = por %p51, %p52
      %p54 = scmp.ne.s32.totalorder %s43, %s44
      %p55 = scmp.eq.s32.totalorder %s21, 0
      %p56 = por %p54, %p55
      %p57 = scmp.ne.s32.totalorder %s43, %s44
      %p58 = scmp.eq.s32.totalorder %s22, 1
      %p59 = por %p57, %p58
      %p61 = scmp.ne.s32.totalorder %s44, %s60
      %p62 = scmp.eq.s32.totalorder %s22, 0
      %p63 = por %p61, %p62
      %s65 = sadd.s32 %s64, 1
      %p68 = scmp.eq.s32.totalorder %s16, 1
      %p69 = scmp.ne.s32.totalorder %s64, %s66
      %p70 = scmp.eq.s32.totalorder %s16, 0
      %p71 = por %p69, %p70
      %p72 = scmp.ne.s32.totalorder %s64, %s66
      %p73 = scmp.eq.s32.totalorder %s21, 1
      %p74 = por %p72, %p73
      %p75 = scmp.ne.s32.totalorder %s66, %s67
      %p76 = scmp.eq.s32.totalorder %s21, 0
      %p77 = por %p75, %p76
      %p78 = scmp.ne.s32.totalorder %s66, %s67
      %p79 = scmp.eq.s32.totalorder %s22, 1
      %p80 = por %p78, %p79
      %p82 = scmp.ne.s32.totalorder %s67, %s81
      %p83 = scmp.eq.s32.totalorder %s22, 0
      %p84 = por %p82, %p83
      %s86 = sadd.s32 %s85, 1
      %p89 = scmp.eq.s32.totalorder %s16, 1
      %p90 = scmp.ne.s32.totalorder %s85, %s87
      %p91 = scmp.eq.s32.totalorder %s16, 0
      %p92 = por %p90, %p91
      %p93 = scmp.ne.s32.totalorder %s85, %s87
      %p94 = scmp.eq.s32.totalorder %s21, 1
      %p95 = por %p93, %p94
      %p96 = scmp.ne.s32.totalorder %s87, %s88
      %p97 = scmp.eq.s32.totalorder %s21, 0
      %p98 = por %p96, %p97
      %p99 = scmp.ne.s32.totalorder %s87, %s88
      %p100 = scmp.eq.s32.totalorder %s22, 1
      %p101 = por %p99, %p100
      %p103 = scmp.ne.s32.totalorder %s88, %s102
      %p104 = scmp.eq.s32.totalorder %s22, 0
      %p105 = por %p103, %p104
      %s106 = ssub.s32 %s23, %s35
      %p107 = scmp.eq.s32.totalorder %s106, 0
      %s109 = sadd.s32 %s108, 1
      %s110 = scalar_select %p107, %s108, %s109
      %p113 = pneg %p107
      %p114 = scmp.eq.s32.totalorder %s16, 1
      %p115 = por %p113, %p114
      %p116 = scmp.ne.s32.totalorder %s108, %s111
      %p117 = scmp.eq.s32.totalorder %s16, 0
      %p118 = por %p116, %p117
      %p119 = scmp.ne.s32.totalorder %s108, %s111
      %p120 = scmp.eq.s32.totalorder %s21, 1
      %p121 = por %p119, %p120
      %p122 = scmp.ne.s32.totalorder %s111, %s112
      %p123 = scmp.eq.s32.totalorder %s21, 0
      %p124 = por %p122, %p123
      %p125 = scmp.ne.s32.totalorder %s111, %s112
      %p126 = scmp.eq.s32.totalorder %s22, 1
      %p127 = por %p125, %p126
      %p129 = scmp.ne.s32.totalorder %s112, %s128
      %p130 = scmp.eq.s32.totalorder %s22, 0
      %p131 = por %p129, %p130
      %p132 = scmp.le.s32.totalorder 1, %s16
      %p133 = scmp.lt.s32.totalorder %s16, 3
      %p134 = pnand %p132, %p133
      %p135 = pneg %p134
      // Predicated region
      $region9: #{tpu_custom_call.1} parent=5 // pred_check
        _
      $region10: #{tpu_custom_call.1} parent=5 // pred_check_branch
        %137 = sbr.rel (%p134) target = $region12
      $region11: #{tpu_custom_call.1} parent=5 // pred_region
        %s138 = ssub.s32 %s16, 1
        // Predicated region
        $region13: #{tpu_custom_call.1} parent=11 // pred_check
          %p139 = pneg %p77
        $region14: #{tpu_custom_call.1} parent=11 // pred_check_branch
          %141 = sbr.rel (%p139) target = $region16
        $region15: #{tpu_custom_call.1} parent=11 // pred_region
          %s143 = ssub.s32 64, 64
          %144 = vsyncadd [#allocation7], %s143
          %s146 = sshll.u32 [#allocation6], 4
          %s147 = int_to_ptr.vmem [resolvable:$true] %s146
          %149 = dma.hbm_to_vmem [thread:$0]  %s1, 64, %s147, [#allocation7]
        $region16: #{tpu_custom_call.1} parent=11 // pred_fallthru
          _
        // Predicated region
        $region17: #{tpu_custom_call.1} parent=11 // pred_check
          %p150 = pneg %p98
        $region18: #{tpu_custom_call.1} parent=11 // pred_check_branch
          %152 = sbr.rel (%p150) target = $region20
        $region19: #{tpu_custom_call.1} parent=11 // pred_region
          _
        $region20: #{tpu_custom_call.1} parent=11 // pred_fallthru
          _
      $region12: #{tpu_custom_call.1} parent=5 // pred_fallthru
        _
      %p153 = scmp.lt.s32.totalorder %s16, 2
      // Predicated region
      $region21: #{tpu_custom_call.1} parent=5 // pred_check
        %p154 = pneg %p153
      $region22: #{tpu_custom_call.1} parent=5 // pred_check_branch
        %156 = sbr.rel (%p154) target = $region24
      $region23: #{tpu_custom_call.1} parent=5 // pred_region
        // Predicated region
        $region25: #{tpu_custom_call.1} parent=23 // pred_check
          %p157 = pneg %p50
        $region26: #{tpu_custom_call.1} parent=23 // pred_check_branch
          %159 = sbr.rel (%p157) target = $region28
        $region27: #{tpu_custom_call.1} parent=23 // pred_region
          %s160 = sand.u32 %s40, 1
          %s161 = scalar_lea.sflag [#allocation4], %s160
          %s162 = sand.u32 %s40, 1
          %s163 = smul.addr %s162, 8
          %s164 = scalar_lea.vmem [#allocation3], %s163
          %s166 = ssub.s32 128, 128
          %167 = vsyncadd %s161, %s166
          %s168 = smul.addr %s23, 4
          %s169 = sadd.s32 %s24, %s168
          %s170 = smul.addr %s169, 32
          %s171 = scalar_lea.hbm %s0, %s170
          %s172 = sshll.u32 %s164, 4
          %s173 = int_to_ptr.vmem [resolvable:$true] %s172
          %178 = dma.hbm_to_vmem [thread:$0]  %s171, 128, %s173, %s161, 32, 32, 2
        $region28: #{tpu_custom_call.1} parent=23 // pred_fallthru
          _
      $region24: #{tpu_custom_call.1} parent=5 // pred_fallthru
        _
      %p179 = scmp.le.s32.totalorder 1, %s16
      %p180 = scmp.lt.s32.totalorder %s16, 3
      %p181 = pnand %p179, %p180
      %p182 = pneg %p181
      // Predicated region
      $region29: #{tpu_custom_call.1} parent=5 // pred_check
        _
      $region30: #{tpu_custom_call.1} parent=5 // pred_check_branch
        %184 = sbr.rel (%p181) target = $region32
      $region31: #{tpu_custom_call.1} parent=5 // pred_region
        %s185 = ssub.s32 %s16, 1
        %s186 = sand.u32 %s43, 1
        %s187 = scalar_lea.sflag [#allocation4], %s186
        %s188 = sand.u32 %s43, 1
        %s189 = smul.addr %s188, 8
        %s190 = scalar_lea.vmem [#allocation3], %s189
        // Predicated region
        $region33: #{tpu_custom_call.1} parent=31 // pred_check
          %p191 = pneg %p56
        $region34: #{tpu_custom_call.1} parent=31 // pred_check_branch
          %193 = sbr.rel (%p191) target = $region36
        $region35: #{tpu_custom_call.1} parent=31 // pred_region
          %194 = dma.done %s187, 128
        $region36: #{tpu_custom_call.1} parent=31 // pred_fallthru
          _
        // Predicated region
        $region37: #{tpu_custom_call.1} parent=31 // pred_check
          %p195 = pneg %p77
        $region38: #{tpu_custom_call.1} parent=31 // pred_check_branch
          %197 = sbr.rel (%p195) target = $region40
        $region39: #{tpu_custom_call.1} parent=31 // pred_region
          %198 = dma.done [#allocation7], 64
        $region40: #{tpu_custom_call.1} parent=31 // pred_fallthru
          _
        %s199 = sand.u32 %s43, 1
        %s200 = scalar_lea.sflag [#allocation4], %s199
        %s201 = sand.u32 %s43, 1
        %s202 = smul.addr %s201, 8
        %s203 = scalar_lea.vmem [#allocation3], %s202
        %p204 = pneg %p56
        %p205 = pneg %p53
        %p206 = pneg %p77
        %p207 = pneg %p74
        %p208 = pneg %p98
        %p209 = pneg %p95
        %p210 = pneg %p124
        %p211 = pneg %p121
        %s212 = sand.u32 %s111, 1
        %s213 = scalar_lea.sflag [#allocation5], %s212
        %s214 = sand.u32 %s111, 1
        %s215 = scalar_lea.vmem [#allocation8], %s214
        %p216 = scmp.eq.s32.totalorder %s26, 0
        // Predicated region
        $region41: #{tpu_custom_call.1} parent=31 // pred_check
          %p217 = pneg %p216
        $region42: #{tpu_custom_call.1} parent=31 // pred_check_branch
          %219 = sbr.rel (%p217) target = $region44
        $region43: #{tpu_custom_call.1} parent=31 // pred_region
          %220 = vst [vmem:[#allocation2] sm:$0xf] 0.0
        $region44: #{tpu_custom_call.1} parent=31 // pred_fallthru
          _
        %v221 = vld [vmem:[%s190] sm:$0x3]
        %v222 = vld [vmem:[%s190 + $0x2] sm:$0x3]
        %v223 = vld [vmem:[%s190 + $0x4] sm:$0x3]
        %v224 = vld [vmem:[%s190 + $0x6] sm:$0x3]
        %v225 = vld [vmem:[#allocation2] sm:$0xf]
        %vm226 = vcmask 1041408
        %v227 = vsel %vm226, %v221, 0.0
        %v228 = vrot.slane %v227, 4
        %v229 = vadd.f32 %v227, %v228
        %v230 = vrot.slane %v229, 2
        %v231 = vadd.f32 %v229, %v230
        %v232 = vrot.slane %v231, 1
        %v233 = vadd.f32 %v231, %v232
        %v234 = vsel %vm226, %v222, 0.0
        %v235 = vrot.slane %v234, 4
        %v236 = vadd.f32 %v234, %v235
        %v237 = vrot.slane %v236, 2
        %v238 = vadd.f32 %v236, %v237
        %v239 = vrot.slane %v238, 1
        %v240 = vadd.f32 %v238, %v239
        %v241 = vsel %vm226, %v223, 0.0
        %v242 = vrot.slane %v241, 4
        %v243 = vadd.f32 %v241, %v242
        %v244 = vrot.slane %v243, 2
        %v245 = vadd.f32 %v243, %v244
        %v246 = vrot.slane %v245, 1
        %v247 = vadd.f32 %v245, %v246
        %v248 = vsel %vm226, %v224, 0.0
        %v249 = vrot.slane %v248, 4
        %v250 = vadd.f32 %v248, %v249
        %v251 = vrot.slane %v250, 2
        %v252 = vadd.f32 %v250, %v251
        %v253 = vrot.slane %v252, 1
        %v254 = vadd.f32 %v252, %v253
        %vm259 = vcmask 1041409
        %v260 = vsel %vm259, %v240, %v233
        %vm261 = vcmask 1042434
        %v262 = vsel %vm261, %v247, %v260
        %vm263 = vcmask 1043459
        %v264 = vsel %vm263, %v254, %v262
        %v266 = vadd.f32 %v225, %v264
        %267 = vst [vmem:[#allocation2] sm:$0xf] %v266
        // Predicated region
        $region45: #{tpu_custom_call.1} parent=31 // pred_check
          %p268 = pneg %p216
        $region46: #{tpu_custom_call.1} parent=31 // pred_check_branch
          %270 = sbr.rel (%p268) target = $region48
        $region47: #{tpu_custom_call.1} parent=31 // pred_region
          %v271 = vld [vmem:[#allocation2] sm:$0xf]
          %vm272 = vcmask 1043456
          %v273 = vsel %vm272, %v271, 0.0
          %274 = vadd.xlane.f32.xlu0 %v273
          %v275 = vpop.xlane.xlu0 %274
          %v276 = vld [vmem:[#allocation6] sm:$0xf]
          %v277 = vmul.f32 %v275, %v276
          %vm278 = vcmask 257024
          %v279 = vsel %vm278, %v277, 0.0
          %v280 = vrot.slane %v279, 4
          %v281 = vadd.f32 %v279, %v280
          %v282 = vrot.slane %v281, 2
          %v283 = vadd.f32 %v281, %v282
          %v284 = vrot.slane %v283, 1
          %v285 = vadd.f32 %v283, %v284
          %v286 = vmul.f32 %v285, 0.00390625
          %v287 = vld [vmem:[%s2] sm:$0x1]
          %v288 = vadd.f32 %v286, %v287
          %vm289 = vcmask 253952
          %290 = vst.msk [vmem:[%s215] sm:$0x1] %vm289, %v288
        $region48: #{tpu_custom_call.1} parent=31 // pred_fallthru
          _
        %s291 = sand.u32 %s111, 1
        %s292 = scalar_lea.sflag [#allocation5], %s291
        %s293 = sand.u32 %s111, 1
        %s294 = scalar_lea.vmem [#allocation8], %s293
        // Predicated region
        $region49: #{tpu_custom_call.1} parent=31 // pred_check
          %p295 = pneg %p121
        $region50: #{tpu_custom_call.1} parent=31 // pred_check_branch
          %297 = sbr.rel (%p295) target = $region52
        $region51: #{tpu_custom_call.1} parent=31 // pred_region
          %s299 = ssub.s32 16, 16
          %300 = vsyncadd %s292, %s299
          %s301 = smul.addr %s25, 16
          %s302 = scalar_lea.hbm %s3, %s301
          %s304 = sshll.u32 %s294, 4
          %s305 = int_to_ptr.vmem [resolvable:$true] %s304
          %307 = dma.vmem_to_hbm [thread:$0]  %s305, 16, %s302, %s292
        $region52: #{tpu_custom_call.1} parent=31 // pred_fallthru
          _
      $region32: #{tpu_custom_call.1} parent=5 // pred_fallthru
        _
      %p308 = scmp.le.s32.totalorder 2, %s16
      // Predicated region
      $region53: #{tpu_custom_call.1} parent=5 // pred_check
        %p309 = pneg %p308
      $region54: #{tpu_custom_call.1} parent=5 // pred_check_branch
        %311 = sbr.rel (%p309) target = $region56
      $region55: #{tpu_custom_call.1} parent=5 // pred_region
        %s312 = ssub.s32 %s16, 2
        // Predicated region
        $region57: #{tpu_custom_call.1} parent=55 // pred_check
          %p313 = pneg %p127
        $region58: #{tpu_custom_call.1} parent=55 // pred_check_branch
          %315 = sbr.rel (%p313) target = $region60
        $region59: #{tpu_custom_call.1} parent=55 // pred_region
          %s316 = sand.u32 %s112, 1
          %s317 = scalar_lea.sflag [#allocation5], %s316
          %s318 = sand.u32 %s112, 1
          %s319 = scalar_lea.vmem [#allocation8], %s318
          %320 = dma.done %s317, 16
        $region60: #{tpu_custom_call.1} parent=55 // pred_fallthru
          _
      $region56: #{tpu_custom_call.1} parent=5 // pred_fallthru
        _
    $region6: #{tpu_custom_call.1} parent=1 // loop_footer
      %s20 = sadd.s32 1, %s16
    $region7: #{tpu_custom_call.1} parent=1 // loop_footer_branch
      %15 = sbr.rel target = $region3
    $region8: #{tpu_custom_call.1} parent=1 // loop_exit
      _
    %321 = vsyncpa [#allocation4], 1
    %s322 = scalar_lea.sflag [#allocation4], 1
    %323 = vsyncpa %s322, 1
    %324 = vsyncpa [#allocation7], 1
    %325 = vsyncpa [#allocation5], 1
    %s326 = scalar_lea.sflag [#allocation5], 1
    %327 = vsyncpa %s326, 1

</llo_original>
